<compile_context>
chip_gen: v5e
topology: v5e:2x2
jax: 0.10.0
libtpu: 0.0.40
codegen_flags: <defaults>
</compile_context>

<pallas_src>
import functools

import jax
import jax.numpy as jnp
from jax.experimental import pallas as pl
from jax.experimental.pallas import tpu as pltpu


def _round_up(x: int, m: int) -> int:
    return ((x + m - 1) // m) * m


def _zoneout_lstm_kernel(xh_ref, h_ref, c_ref, w_ref, b_ref, out_ref, *,
                         zoneout: float, hp: int):
    """One batch tile of the fused ZoneOut-LSTMCell.

    xh_ref : [TB, Din+H]   concatenated input and previous hidden state
    h_ref  : [TB, Hp]      previous hidden state (lane-padded)
    c_ref  : [TB, Hp]      previous cell state   (lane-padded)
    w_ref  : [Din+H, 4*Hp] fused, pre-transposed, gate-padded weight
    b_ref  : [1, 4*Hp]     pre-folded bias (b_ih + b_hh)
    out_ref: [TB, 2*Hp]    lane-dense output slab: [h_out | c_out]
    """
    # Single MXU pass; operands keep their native dtype (bf16 path on v6e/v7x),
    # accumulation in f32.
    gates = jnp.dot(xh_ref[...], w_ref[...], preferred_element_type=jnp.float32)
    gates = gates + b_ref[...].astype(jnp.float32)

    # Lane-dense gate slices (each Hp-wide, Hp a multiple of 128).
    i_g = jax.nn.sigmoid(gates[:, 0 * hp:1 * hp])
    f_g = jax.nn.sigmoid(gates[:, 1 * hp:2 * hp])
    g_g = jnp.tanh(gates[:, 2 * hp:3 * hp])
    o_g = jax.nn.sigmoid(gates[:, 3 * hp:4 * hp])

    h = h_ref[...].astype(jnp.float32)
    c = c_ref[...].astype(jnp.float32)

    c_new = f_g * c + i_g * g_g
    h_new = o_g * jnp.tanh(c_new)

    p = jnp.float32(zoneout)
    q = jnp.float32(1.0 - zoneout)
    h_mix = p * h + q * h_new
    c_mix = p * c + q * c_new

    out_ref[...] = jnp.concatenate([h_mix, c_mix], axis=-1).astype(out_ref.dtype)


def zoneout_lstm_cell(x, h, c, w_ih, w_hh, b_ih, b_hh, *, zoneout=0.1):
    """ZoneOutCell(LSTMCell).forward in eval mode.

    x: [B, Din], h/c: [B, H]
    w_ih: [4H, Din], w_hh: [4H, H], b_ih/b_hh: [4H]   (PyTorch parameter shapes)
    Returns (h_out, c_out), each [B, H].
    """
    x = jnp.asarray(x)
    h = jnp.asarray(h)
    c = jnp.asarray(c)
    B, Din = x.shape
    _, H = h.shape

    Hp = _round_up(H, 128)          # lane-dense hidden dim
    Kc = Din + H                    # fused contraction dim

    # --- fused / pre-transposed parameters (hoist out of any time loop) ------
    # W_cat = [W_ih | W_hh] : [4H, Din+H];  [x|h] @ W_cat^T == x@W_ih^T + h@W_hh^T
    w_cat_t = jnp.concatenate([jnp.asarray(w_ih), jnp.asarray(w_hh)], axis=1).T
    # pad each gate's column block from H to Hp -> [Kc, 4*Hp]
    w_fused = jnp.pad(w_cat_t.reshape(Kc, 4, H),
                      ((0, 0), (0, 0), (0, Hp - H))).reshape(Kc, 4 * Hp)
    b_fused = jnp.pad((jnp.asarray(b_ih) + jnp.asarray(b_hh)).reshape(4, H),
                      ((0, 0), (0, Hp - H))).reshape(1, 4 * Hp)

    # --- batch tiling ---------------------------------------------------------
    TB = min(128, _round_up(B, 8))      # conservative for v7x's 64 MiB VMEM
    Bp = _round_up(B, TB)

    xh = jnp.concatenate([x, h], axis=-1)                       # [B, Kc]
    xh = jnp.pad(xh, ((0, Bp - B), (0, 0)))
    h_p = jnp.pad(h, ((0, Bp - B), (0, Hp - H)))
    c_p = jnp.pad(c, ((0, Bp - B), (0, Hp - H)))

    kernel = functools.partial(_zoneout_lstm_kernel,
                               zoneout=float(zoneout), hp=Hp)

    out = pl.pallas_call(
        kernel,
        out_shape=jax.ShapeDtypeStruct((Bp, 2 * Hp), h.dtype),
        grid=(Bp // TB,),
        in_specs=[
            pl.BlockSpec((TB, Kc), lambda i: (i, 0)),          # xh tile
            pl.BlockSpec((TB, Hp), lambda i: (i, 0)),          # h tile
            pl.BlockSpec((TB, Hp), lambda i: (i, 0)),          # c tile
            pl.BlockSpec((Kc, 4 * Hp), lambda i: (0, 0)),      # weights: resident
            pl.BlockSpec((1, 4 * Hp), lambda i: (0, 0)),       # bias: resident
        ],
        out_specs=pl.BlockSpec((TB, 2 * Hp), lambda i: (i, 0)),
        compiler_params=pltpu.CompilerParams(
            dimension_semantics=("parallel",)),
    )(xh, h_p, c_p, w_fused, b_fused)

    h_out = out[:B, :H]
    c_out = out[:B, Hp:Hp + H].astype(c.dtype)
    return h_out, c_out


def _reference(x, h, c, w_ih, w_hh, b_ih, b_hh, zoneout=0.1):
    gates = x @ w_ih.T + b_ih + h @ w_hh.T + b_hh
    H = h.shape[-1]
    i = jax.nn.sigmoid(gates[:, :H])
    f = jax.nn.sigmoid(gates[:, H:2 * H])
    g = jnp.tanh(gates[:, 2 * H:3 * H])
    o = jax.nn.sigmoid(gates[:, 3 * H:])
    c_new = f * c + i * g
    h_new = o * jnp.tanh(c_new)
    return (zoneout * h + (1 - zoneout) * h_new,
            zoneout * c + (1 - zoneout) * c_new)


if __name__ == "__main__":
    B, DIN, H = 8, 48, 32
    ZONEOUT = 0.1

    key = jax.random.PRNGKey(0)
    kx, kh, kc, k1, k2, k3, k4 = jax.random.split(key, 7)

    # Deterministic parameter init, matching PyTorch LSTMCell's U(-1/sqrt(H), 1/sqrt(H)).
    bound = 1.0 / jnp.sqrt(jnp.float32(H))
    w_ih = jax.random.uniform(k1, (4 * H, DIN), jnp.float32, -bound, bound)
    w_hh = jax.random.uniform(k2, (4 * H, H), jnp.float32, -bound, bound)
    b_ih = jax.random.uniform(k3, (4 * H,), jnp.float32, -bound, bound)
    b_hh = jax.random.uniform(k4, (4 * H,), jnp.float32, -bound, bound)

    x = jax.random.normal(kx, (B, DIN), jnp.float32)
    h0 = jax.random.normal(kh, (B, H), jnp.float32)
    c0 = jax.random.normal(kc, (B, H), jnp.float32)

    h1, c1 = zoneout_lstm_cell(x, h0, c0, w_ih, w_hh, b_ih, b_hh, zoneout=ZONEOUT)
    jax.block_until_ready((h1, c1))

    h_ref, c_ref = _reference(x, h0, c0, w_ih, w_hh, b_ih, b_hh, ZONEOUT)
    # Slightly looser tolerance: fused-K matmul + pre-folded bias change the
    # f32 accumulation order relative to the two-matmul reference.
    assert jnp.allclose(h1, h_ref, atol=2e-5, rtol=2e-5), "h mismatch"
    assert jnp.allclose(c1, c_ref, atol=2e-5, rtol=2e-5), "c mismatch"

    print("KERNEL_OK")
</pallas_src>

<mosaic_0001>
module attributes {stable_mosaic.version = 11 : i64} {
  func.func @_zoneout_lstm_kernel(%arg0: i32, %arg1: memref<8x80xf32, #tpu.memory_space<vmem>>, %arg2: memref<8x128xf32, #tpu.memory_space<vmem>>, %arg3: memref<8x128xf32, #tpu.memory_space<vmem>>, %arg4: memref<80x512xf32, #tpu.memory_space<vmem>>, %arg5: memref<1x512xf32, #tpu.memory_space<vmem>>, %arg6: memref<8x256xf32, #tpu.memory_space<vmem>>) attributes {dimension_semantics = [#tpu.dimension_semantics<parallel>], iteration_bounds = array<i64: 1>, scalar_prefetch = 0 : i64, scratch_operands = 0 : i64, tpu.core_type = #tpu.core_type<tc>, window_params = [{transform_indices = @transform_0, window_bounds = array<i64: 8, 80>}, {transform_indices = @transform_1, window_bounds = array<i64: 8, 128>}, {transform_indices = @transform_2, window_bounds = array<i64: 8, 128>}, {pipeline_mode = #tpu.pipeline_mode<synchronous>, transform_indices = @transform_3, window_bounds = array<i64: 80, 512>}, {pipeline_mode = #tpu.pipeline_mode<synchronous>, transform_indices = @transform_4, window_bounds = array<i64: 1, 512>}, {transform_indices = @transform_5, window_bounds = array<i64: 8, 256>}]} {
    %c0 = arith.constant 0 : index
    %c0_0 = arith.constant 0 : index
    %0 = vector.load %arg1[%c0, %c0_0] : memref<8x80xf32, #tpu.memory_space<vmem>>, vector<8x80xf32>
    %c0_1 = arith.constant 0 : index
    %c0_2 = arith.constant 0 : index
    %1 = vector.load %arg4[%c0_1, %c0_2] : memref<80x512xf32, #tpu.memory_space<vmem>>, vector<80x512xf32>
    %cst = arith.constant dense<0.000000e+00> : vector<8x512xf32>
    %2 = tpu.matmul %0, %1, %cst {dimension_numbers = #tpu.dot_dimension_numbers<[1], [0], [0], [1], [0, 0, 1, 1], [], []>} : vector<8x80xf32>, vector<80x512xf32>, vector<8x512xf32> -> vector<8x512xf32>
    %c0_3 = arith.constant 0 : index
    %c0_4 = arith.constant 0 : index
    %3 = vector.load %arg5[%c0_3, %c0_4] : memref<1x512xf32, #tpu.memory_space<vmem>>, vector<1x512xf32>
    %4 = vector.broadcast %3 : vector<1x512xf32> to vector<8x512xf32>
    %5 = arith.addf %2, %4 : vector<8x512xf32>
    %6 = vector.extract_strided_slice %5 {offsets = [0, 0], sizes = [8, 128], strides = [1, 1]} : vector<8x512xf32> to vector<8x128xf32>
    %7 = arith.negf %6 : vector<8x128xf32>
    %8 = math.exp %7 : vector<8x128xf32>
    %cst_5 = arith.constant 1.000000e+00 : f32
    %9 = vector.broadcast %cst_5 : f32 to vector<8x128xf32>
    %10 = arith.addf %9, %8 : vector<8x128xf32>
    %11 = arith.divf %9, %10 : vector<8x128xf32>
    %12 = vector.extract_strided_slice %5 {offsets = [0, 128], sizes = [8, 128], strides = [1, 1]} : vector<8x512xf32> to vector<8x128xf32>
    %13 = arith.negf %12 : vector<8x128xf32>
    %14 = math.exp %13 : vector<8x128xf32>
    %cst_6 = arith.constant 1.000000e+00 : f32
    %15 = vector.broadcast %cst_6 : f32 to vector<8x128xf32>
    %16 = arith.addf %15, %14 : vector<8x128xf32>
    %17 = arith.divf %15, %16 : vector<8x128xf32>
    %18 = vector.extract_strided_slice %5 {offsets = [0, 256], sizes = [8, 128], strides = [1, 1]} : vector<8x512xf32> to vector<8x128xf32>
    %19 = math.tanh %18 : vector<8x128xf32>
    %20 = vector.extract_strided_slice %5 {offsets = [0, 384], sizes = [8, 128], strides = [1, 1]} : vector<8x512xf32> to vector<8x128xf32>
    %21 = arith.negf %20 : vector<8x128xf32>
    %22 = math.exp %21 : vector<8x128xf32>
    %cst_7 = arith.constant 1.000000e+00 : f32
    %23 = vector.broadcast %cst_7 : f32 to vector<8x128xf32>
    %24 = arith.addf %23, %22 : vector<8x128xf32>
    %25 = arith.divf %23, %24 : vector<8x128xf32>
    %c0_8 = arith.constant 0 : index
    %c0_9 = arith.constant 0 : index
    %26 = vector.load %arg2[%c0_8, %c0_9] : memref<8x128xf32, #tpu.memory_space<vmem>>, vector<8x128xf32>
    %c0_10 = arith.constant 0 : index
    %c0_11 = arith.constant 0 : index
    %27 = vector.load %arg3[%c0_10, %c0_11] : memref<8x128xf32, #tpu.memory_space<vmem>>, vector<8x128xf32>
    %28 = arith.mulf %17, %27 : vector<8x128xf32>
    %29 = arith.mulf %11, %19 : vector<8x128xf32>
    %30 = arith.addf %28, %29 : vector<8x128xf32>
    %31 = math.tanh %30 : vector<8x128xf32>
    %32 = arith.mulf %25, %31 : vector<8x128xf32>
    %cst_12 = arith.constant 1.000000e-01 : f32
    %33 = vector.broadcast %cst_12 : f32 to vector<8x128xf32>
    %34 = arith.mulf %33, %26 : vector<8x128xf32>
    %cst_13 = arith.constant 0.899999976 : f32
    %35 = vector.broadcast %cst_13 : f32 to vector<8x128xf32>
    %36 = arith.mulf %35, %32 : vector<8x128xf32>
    %37 = arith.addf %34, %36 : vector<8x128xf32>
    %cst_14 = arith.constant 1.000000e-01 : f32
    %38 = vector.broadcast %cst_14 : f32 to vector<8x128xf32>
    %39 = arith.mulf %38, %27 : vector<8x128xf32>
    %cst_15 = arith.constant 0.899999976 : f32
    %40 = vector.broadcast %cst_15 : f32 to vector<8x128xf32>
    %41 = arith.mulf %40, %30 : vector<8x128xf32>
    %42 = arith.addf %39, %41 : vector<8x128xf32>
    %43 = tpu.concatenate %37, %42 in 1 : vector<8x128xf32>, vector<8x128xf32> -> vector<8x256xf32>
    %c0_16 = arith.constant 0 : index
    %c0_17 = arith.constant 0 : index
    %44 = vector.load %arg6[%c0_16, %c0_17] : memref<8x256xf32, #tpu.memory_space<vmem>>, vector<8x256xf32>
    tpu.vector_store %arg6[%c0_16, %c0_17], %43 {strides = array<i32>} : memref<8x256xf32, #tpu.memory_space<vmem>>, vector<8x256xf32>,
    return
  }
  func.func @transform_0(%arg0: i32) -> (i32, i32) {
    %c0_i32 = arith.constant 0 : i32
    %c0_i32_0 = arith.constant 0 : i32
    return %arg0, %c0_i32 : i32, i32
  }
  func.func @transform_1(%arg0: i32) -> (i32, i32) {
    %c0_i32 = arith.constant 0 : i32
    %c0_i32_0 = arith.constant 0 : i32
    return %arg0, %c0_i32 : i32, i32
  }
  func.func @transform_2(%arg0: i32) -> (i32, i32) {
    %c0_i32 = arith.constant 0 : i32
    %c0_i32_0 = arith.constant 0 : i32
    return %arg0, %c0_i32 : i32, i32
  }
  func.func @transform_3(%arg0: i32) -> (i32, i32) {
    %c0_i32 = arith.constant 0 : i32
    %c0_i32_0 = arith.constant 0 : i32
    %c0_i32_1 = arith.constant 0 : i32
    return %c0_i32, %c0_i32_0 : i32, i32
  }
  func.func @transform_4(%arg0: i32) -> (i32, i32) {
    %c0_i32 = arith.constant 0 : i32
    %c0_i32_0 = arith.constant 0 : i32
    %c0_i32_1 = arith.constant 0 : i32
    return %c0_i32, %c0_i32_0 : i32, i32
  }
  func.func @transform_5(%arg0: i32) -> (i32, i32) {
    %c0_i32 = arith.constant 0 : i32
    %c0_i32_0 = arith.constant 0 : i32
    return %arg0, %c0_i32 : i32, i32
  }
}

</mosaic_0001>

<llo_original>
// kernel: tpu_custom_call.1
$region0: #{tpu_custom_call.1}
  #allocation0 [shape = 'u32[]', space=smem, size = 0x4, offset = 0x4, fixed_abs, tag = 'smem constant byte address 0x4 - core index']
  #allocation1 [shape = 'u32[72,128]{1,0:T(1,128)}', space=vmem, size = 0x9000, scoped, tag = 'internal scratch']
  %s0 = inlined_call_operand.hbm [shape: f32[8,80], index: 0, kind: input, shape index: {}]
  %s1 = inlined_call_operand.hbm [shape: f32[8,128], index: 1, kind: input, shape index: {}]
  %s2 = inlined_call_operand.hbm [shape: f32[8,128], index: 2, kind: input, shape index: {}]
  %s3 = inlined_call_operand.hbm [shape: f32[80,512], index: 3, kind: input, shape index: {}]
  %s4 = inlined_call_operand.hbm [shape: f32[1,512], index: 4, kind: input, shape index: {}]
  %s5 = inlined_call_operand.hbm [shape: f32[8,256], index: 5, kind: output, shape index: {}]
  %s6 = sld [smem:[#allocation0]]
  $region50: #{tpu_custom_call.1} parent=0
    _
  %s8 = ssub.s32 1, %s6
  %s9 = scalar_select 0, %s8, %s6
  $region1: #{tpu_custom_call.1} parent=0
    #allocation2 [shape = 'u8[4096]{0}', space=vmem, size = 0x1000, scoped, tag = 'input window, operand 0, single buffered']
    #allocation3 [shape = 's32[1]{0}', space=sflag, size = 0x4, scoped, tag = 'scoped memory for tpu_custom_call.1']
    #allocation4 [shape = 's32[1]{0}', space=sflag, size = 0x4, scoped, tag = 'scoped memory for tpu_custom_call.1']
    #allocation5 [shape = 'u8[4096]{0}', space=vmem, size = 0x1000, scoped, tag = 'input window, operand 1, single buffered']
    #allocation6 [shape = 's32[1]{0}', space=sflag, size = 0x4, scoped, tag = 'scoped memory for tpu_custom_call.1']
    #allocation7 [shape = 'u8[4096]{0}', space=vmem, size = 0x1000, scoped, tag = 'input window, operand 2, single buffered']
    #allocation8 [shape = 'u8[163840]{0}', space=vmem, size = 0x28000, scoped, tag = 'input window, operand 3, single buffered']
    #allocation9 [shape = 's32[1]{0}', space=sflag, size = 0x4, scoped, tag = 'scoped memory for tpu_custom_call.1']
    #allocation10 [shape = 'u8[2048]{0}', space=vmem, size = 0x800, scoped, tag = 'input window, operand 4, single buffered']
    #allocation11 [shape = 'u8[8192]{0}', space=vmem, size = 0x2000, scoped, tag = 'output window, operand 0, single buffered']
    %10 = vsyncpa [#allocation3], 0
    %11 = vsyncpa [#allocation6], 0
    %12 = vsyncpa [#allocation9], 0
    %13 = vsyncpa [#allocation4], 0
    // Predicated region
    $region2: #{tpu_custom_call.1} parent=1 // pred_check
      _
    $region3: #{tpu_custom_call.1} parent=1 // pred_check_branch
      %15 = sbr.rel (0) target = $region5
    $region4: #{tpu_custom_call.1} parent=1 // pred_region
      %17 = vsyncadd [#allocation3], 0
      %s19 = sshll.u32 %s0, 4
      %s20 = int_to_ptr.hbm [resolvable:$true] %s19
      %s21 = sshll.u32 [#allocation2], 4
      %s22 = int_to_ptr.vmem [resolvable:$true] %s21
      %24 = dma.hbm_to_vmem [thread:$0]  %s20, 128, %s22, [#allocation3]
    $region5: #{tpu_custom_call.1} parent=1 // pred_fallthru
      _
    // Predicated region
    $region6: #{tpu_custom_call.1} parent=1 // pred_check
      _
    $region7: #{tpu_custom_call.1} parent=1 // pred_check_branch
      %26 = sbr.rel (0) target = $region9
    $region8: #{tpu_custom_call.1} parent=1 // pred_region
      %28 = vsyncadd [#allocation6], 0
      %s30 = sshll.u32 %s1, 4
      %s31 = int_to_ptr.hbm [resolvable:$true] %s30
      %s32 = sshll.u32 [#allocation5], 4
      %s33 = int_to_ptr.vmem [resolvable:$true] %s32
      %35 = dma.hbm_to_vmem [thread:$0]  %s31, 128, %s33, [#allocation6]
    $region9: #{tpu_custom_call.1} parent=1 // pred_fallthru
      _
    // Predicated region
    $region10: #{tpu_custom_call.1} parent=1 // pred_check
      _
    $region11: #{tpu_custom_call.1} parent=1 // pred_check_branch
      %37 = sbr.rel (0) target = $region13
    $region12: #{tpu_custom_call.1} parent=1 // pred_region
      %39 = vsyncadd [#allocation6], 0
      %s41 = sshll.u32 %s2, 4
      %s42 = int_to_ptr.hbm [resolvable:$true] %s41
      %s43 = sshll.u32 [#allocation7], 4
      %s44 = int_to_ptr.vmem [resolvable:$true] %s43
      %46 = dma.hbm_to_vmem [thread:$0]  %s42, 128, %s44, [#allocation6]
    $region13: #{tpu_custom_call.1} parent=1 // pred_fallthru
      _
    // Predicated region
    $region14: #{tpu_custom_call.1} parent=1 // pred_check
      _
    $region15: #{tpu_custom_call.1} parent=1 // pred_check_branch
      %48 = sbr.rel (0) target = $region17
    $region16: #{tpu_custom_call.1} parent=1 // pred_region
      %50 = vsyncadd [#allocation9], 0
      %s51 = sshll.u32 %s3, 4
      %s52 = int_to_ptr.hbm [resolvable:$true] %s51
      %s53 = sshll.u32 [#allocation8], 4
      %s54 = int_to_ptr.vmem [resolvable:$true] %s53
      %59 = dma.hbm_to_vmem [thread:$0]  %s52, 5120, %s54, [#allocation9], 512, 512, 32
    $region17: #{tpu_custom_call.1} parent=1 // pred_fallthru
      _
    // Predicated region
    $region18: #{tpu_custom_call.1} parent=1 // pred_check
      _
    $region19: #{tpu_custom_call.1} parent=1 // pred_check_branch
      %61 = sbr.rel (0) target = $region21
    $region20: #{tpu_custom_call.1} parent=1 // pred_region
      %63 = vsyncadd [#allocation9], 0
      %s65 = sshll.u32 %s4, 4
      %s66 = int_to_ptr.hbm [resolvable:$true] %s65
      %s67 = sshll.u32 [#allocation10], 4
      %s68 = int_to_ptr.vmem [resolvable:$true] %s67
      %70 = dma.hbm_to_vmem [thread:$0]  %s66, 64, %s68, [#allocation9]
    $region21: #{tpu_custom_call.1} parent=1 // pred_fallthru
      _
    // Predicated region
    $region22: #{tpu_custom_call.1} parent=1 // pred_check
      _
    $region23: #{tpu_custom_call.1} parent=1 // pred_check_branch
      %72 = sbr.rel (0) target = $region25
    $region24: #{tpu_custom_call.1} parent=1 // pred_region
      %74 = dma.done [#allocation3], 128
    $region25: #{tpu_custom_call.1} parent=1 // pred_fallthru
      _
    // Predicated region
    $region26: #{tpu_custom_call.1} parent=1 // pred_check
      _
    $region27: #{tpu_custom_call.1} parent=1 // pred_check_branch
      %76 = sbr.rel (0) target = $region29
    $region28: #{tpu_custom_call.1} parent=1 // pred_region
      %78 = dma.done [#allocation6], 128
    $region29: #{tpu_custom_call.1} parent=1 // pred_fallthru
      _
    // Predicated region
    $region30: #{tpu_custom_call.1} parent=1 // pred_check
      _
    $region31: #{tpu_custom_call.1} parent=1 // pred_check_branch
      %80 = sbr.rel (0) target = $region33
    $region32: #{tpu_custom_call.1} parent=1 // pred_region
      %82 = dma.done [#allocation6], 128
    $region33: #{tpu_custom_call.1} parent=1 // pred_fallthru
      _
    // Predicated region
    $region34: #{tpu_custom_call.1} parent=1 // pred_check
      _
    $region35: #{tpu_custom_call.1} parent=1 // pred_check_branch
      %84 = sbr.rel (0) target = $region37
    $region36: #{tpu_custom_call.1} parent=1 // pred_region
      %86 = dma.done [#allocation9], 5120
    $region37: #{tpu_custom_call.1} parent=1 // pred_fallthru
      _
    // Predicated region
    $region38: #{tpu_custom_call.1} parent=1 // pred_check
      _
    $region39: #{tpu_custom_call.1} parent=1 // pred_check_branch
      %88 = sbr.rel (0) target = $region41
    $region40: #{tpu_custom_call.1} parent=1 // pred_region
      %90 = dma.done [#allocation9], 64
    $region41: #{tpu_custom_call.1} parent=1 // pred_fallthru
      _
    %v91 = vld [vmem:[#allocation2] sm:$0xff]
    %v92 = vld [vmem:[#allocation8] sm:$0xff]
    %v93 = vld [vmem:[#allocation8 + $0x8] sm:$0xff]
    %v94 = vld [vmem:[#allocation8 + $0x10] sm:$0xff]
    %v95 = vld [vmem:[#allocation8 + $0x18] sm:$0xff]
    %v96 = vld [vmem:[#allocation8 + $0x20] sm:$0xff]
    %v97 = vld [vmem:[#allocation8 + $0x28] sm:$0xff]
    %v98 = vld [vmem:[#allocation8 + $0x30] sm:$0xff]
    %v99 = vld [vmem:[#allocation8 + $0x38] sm:$0xff]
    %v100 = vld [vmem:[#allocation8 + $0x40] sm:$0xff]
    %v101 = vld [vmem:[#allocation8 + $0x48] sm:$0xff]
    %v102 = vld [vmem:[#allocation8 + $0x50] sm:$0xff]
    %v103 = vld [vmem:[#allocation8 + $0x58] sm:$0xff]
    %v104 = vld [vmem:[#allocation8 + $0x60] sm:$0xff]
    %v105 = vld [vmem:[#allocation8 + $0x68] sm:$0xff]
    %v106 = vld [vmem:[#allocation8 + $0x70] sm:$0xff]
    %v107 = vld [vmem:[#allocation8 + $0x78] sm:$0xff]
    %v108 = vld [vmem:[#allocation8 + $0x80] sm:$0xff]
    %v109 = vld [vmem:[#allocation8 + $0x88] sm:$0xff]
    %v110 = vld [vmem:[#allocation8 + $0x90] sm:$0xff]
    %v111 = vld [vmem:[#allocation8 + $0x98] sm:$0xff]
    %v112 = vld [vmem:[#allocation8 + $0xa0] sm:$0xff]
    %v113 = vld [vmem:[#allocation8 + $0xa8] sm:$0xff]
    %v114 = vld [vmem:[#allocation8 + $0xb0] sm:$0xff]
    %v115 = vld [vmem:[#allocation8 + $0xb8] sm:$0xff]
    %v116 = vld [vmem:[#allocation8 + $0xc0] sm:$0xff]
    %v117 = vld [vmem:[#allocation8 + $0xc8] sm:$0xff]
    %v118 = vld [vmem:[#allocation8 + $0xd0] sm:$0xff]
    %v119 = vld [vmem:[#allocation8 + $0xd8] sm:$0xff]
    %v120 = vld [vmem:[#allocation8 + $0xe0] sm:$0xff]
    %v121 = vld [vmem:[#allocation8 + $0xe8] sm:$0xff]
    %v122 = vld [vmem:[#allocation8 + $0xf0] sm:$0xff]
    %v123 = vld [vmem:[#allocation8 + $0xf8] sm:$0xff]
    %v124 = vld [vmem:[#allocation8 + $0x100] sm:$0xff]
    %v125 = vld [vmem:[#allocation8 + $0x108] sm:$0xff]
    %v126 = vld [vmem:[#allocation8 + $0x110] sm:$0xff]
    %v127 = vld [vmem:[#allocation8 + $0x118] sm:$0xff]
    %v128 = vld [vmem:[#allocation8 + $0x120] sm:$0xff]
    %v129 = vld [vmem:[#allocation8 + $0x128] sm:$0xff]
    %v130 = vld [vmem:[#allocation8 + $0x130] sm:$0xff]
    %v131 = vld [vmem:[#allocation8 + $0x138] sm:$0xff]
    %v132 = vld [vmem:[#allocation10] sm:$0xf]
    %v134 = vperm.slane %v132, 0
    %v135 = vperm.slane %v132, 1
    %v136 = vperm.slane %v132, 2
    %v137 = vperm.slane %v132, 3
    %vm142 = vcmask 654336
    %v144 = vsel %vm142, %v91, 0
    %146 = vmatpush.msra.mxu0 0.0
    %147 = vmatpush.msra.mxu0 0.0
    %148 = vmatpush.msra.mxu0 0.0
    %149 = vmatpush.msra.mxu0 0.0
    %150 = vmatpush.msra.mxu0 0.0
    %151 = vmatpush.msra.mxu0 0.0
    %152 = vmatpush.msra.mxu0 %v128
    %153 = vmatpush.msra.mxu0 %v124
    %154 = vmatpush.msra.mxu0 %v120
    %155 = vmatpush.msra.mxu0 %v116
    %156 = vmatpush.msra.mxu0 %v112
    %157 = vmatpush.msra.mxu0 %v108
    %158 = vmatpush.msra.mxu0 %v104
    %159 = vmatpush.msra.mxu0 %v100
    %160 = vmatpush.msra.mxu0 %v96
    %161 = vmatpush.msra.mxu0 %v92
    %162 = vmatmul.f32.gmra.mxu0 %v144
    %v163 = vpop.f32.mrf.mxu0
    %v164 = vadd.f32 %v134, %v163
    %165 = vdwg.mxu0
    %166 = vmatpush.msra.mxu0 0.0
    %167 = vmatpush.msra.mxu0 0.0
    %168 = vmatpush.msra.mxu0 0.0
    %169 = vmatpush.msra.mxu0 0.0
    %170 = vmatpush.msra.mxu0 0.0
    %171 = vmatpush.msra.mxu0 0.0
    %172 = vmatpush.msra.mxu0 %v129
    %173 = vmatpush.msra.mxu0 %v125
    %174 = vmatpush.msra.mxu0 %v121
    %175 = vmatpush.msra.mxu0 %v117
    %176 = vmatpush.msra.mxu0 %v113
    %177 = vmatpush.msra.mxu0 %v109
    %178 = vmatpush.msra.mxu0 %v105
    %179 = vmatpush.msra.mxu0 %v101
    %180 = vmatpush.msra.mxu0 %v97
    %181 = vmatpush.msra.mxu0 %v93
    %182 = vmatmul.f32.gmra.mxu0 %v144
    %v183 = vpop.f32.mrf.mxu0
    %v184 = vadd.f32 %v135, %v183
    %185 = vdwg.mxu0
    %186 = vmatpush.msra.mxu0 0.0
    %187 = vmatpush.msra.mxu0 0.0
    %188 = vmatpush.msra.mxu0 0.0
    %189 = vmatpush.msra.mxu0 0.0
    %190 = vmatpush.msra.mxu0 0.0
    %191 = vmatpush.msra.mxu0 0.0
    %192 = vmatpush.msra.mxu0 %v130
    %193 = vmatpush.msra.mxu0 %v126
    %194 = vmatpush.msra.mxu0 %v122
    %195 = vmatpush.msra.mxu0 %v118
    %196 = vmatpush.msra.mxu0 %v114
    %197 = vmatpush.msra.mxu0 %v110
    %198 = vmatpush.msra.mxu0 %v106
    %199 = vmatpush.msra.mxu0 %v102
    %200 = vmatpush.msra.mxu0 %v98
    %201 = vmatpush.msra.mxu0 %v94
    %202 = vmatmul.f32.gmra.mxu0 %v144
    %v203 = vpop.f32.mrf.mxu0
    %v204 = vadd.f32 %v136, %v203
    %205 = vdwg.mxu0
    %206 = vmatpush.msra.mxu0 0.0
    %207 = vmatpush.msra.mxu0 0.0
    %208 = vmatpush.msra.mxu0 0.0
    %209 = vmatpush.msra.mxu0 0.0
    %210 = vmatpush.msra.mxu0 0.0
    %211 = vmatpush.msra.mxu0 0.0
    %212 = vmatpush.msra.mxu0 %v131
    %213 = vmatpush.msra.mxu0 %v127
    %214 = vmatpush.msra.mxu0 %v123
    %215 = vmatpush.msra.mxu0 %v119
    %216 = vmatpush.msra.mxu0 %v115
    %217 = vmatpush.msra.mxu0 %v111
    %218 = vmatpush.msra.mxu0 %v107
    %219 = vmatpush.msra.mxu0 %v103
    %220 = vmatpush.msra.mxu0 %v99
    %221 = vmatpush.msra.mxu0 %v95
    %222 = vmatmul.f32.gmra.mxu0 %v144
    %v223 = vpop.f32.mrf.mxu0
    %v224 = vadd.f32 %v137, %v223
    %225 = vdwg.mxu0
    %v226 = vxor.u32 %v164, 2147483648
    %v227 = vmul.f32 %v226, 1.442695
    %v228 = vpow.pop %v227
    %v229 = vadd.f32 %v228, 1.0
    %v230 = vrcp.pop %v229
    %v231 = vmul.f32 %v229, %v230
    %v232 = vsub.f32 1.0, %v231
    %v233 = vmul.f32 %v230, %v232
    %v234 = vadd.f32 %v230, %v233
    %vm235 = vweird.f32 %v229
    %vm236 = vweird.f32 %v230
    %vm237 = vmor %vm235, %vm236
    %v238 = vsel %vm237, %v230, %v234
    %v239 = vand.u32 2147483647, %v229
    %vm240 = vcmp.eq.f32.partialorder %v239, 8.507059e+37
    %v241 = vand.u32 %v229, 2147483648
    %v242 = vor.u32 1.1754944e-38, %v241
    %v243 = vsel %vm240, %v242, %v238
    %v244 = vmul.f32 1.0, %v243
    %v245 = vxor.u32 %v184, 2147483648
    %v246 = vmul.f32 %v245, 1.442695
    %v247 = vpow.pop %v246
    %v248 = vadd.f32 %v247, 1.0
    %v249 = vrcp.pop %v248
    %v250 = vmul.f32 %v248, %v249
    %v251 = vsub.f32 1.0, %v250
    %v252 = vmul.f32 %v249, %v251
    %v253 = vadd.f32 %v249, %v252
    %vm254 = vweird.f32 %v248
    %vm255 = vweird.f32 %v249
    %vm256 = vmor %vm254, %vm255
    %v257 = vsel %vm256, %v249, %v253
    %v258 = vand.u32 2147483647, %v248
    %vm259 = vcmp.eq.f32.partialorder %v258, 8.507059e+37
    %v260 = vand.u32 %v248, 2147483648
    %v261 = vor.u32 1.1754944e-38, %v260
    %v262 = vsel %vm259, %v261, %v257
    %v263 = vmul.f32 1.0, %v262
    %v264 = vtanh.pop %v204
    %v265 = vxor.u32 %v224, 2147483648
    %v266 = vmul.f32 %v265, 1.442695
    %v267 = vpow.pop %v266
    %v268 = vadd.f32 %v267, 1.0
    %v269 = vrcp.pop %v268
    %v270 = vmul.f32 %v268, %v269
    %v271 = vsub.f32 1.0, %v270
    %v272 = vmul.f32 %v269, %v271
    %v273 = vadd.f32 %v269, %v272
    %vm274 = vweird.f32 %v268
    %vm275 = vweird.f32 %v269
    %vm276 = vmor %vm274, %vm275
    %v277 = vsel %vm276, %v269, %v273
    %v278 = vand.u32 2147483647, %v268
    %vm279 = vcmp.eq.f32.partialorder %v278, 8.507059e+37
    %v280 = vand.u32 %v268, 2147483648
    %v281 = vor.u32 1.1754944e-38, %v280
    %v282 = vsel %vm279, %v281, %v277
    %v283 = vmul.f32 1.0, %v282
    %v284 = vld [vmem:[#allocation5] sm:$0xff]
    %v285 = vld [vmem:[#allocation7] sm:$0xff]
    %v286 = vmul.f32 %v263, %v285
    %v287 = vmul.f32 %v244, %v264
    %v288 = vadd.f32 %v286, %v287
    %v289 = vtanh.pop %v288
    %v290 = vmul.f32 %v283, %v289
    %v291 = vmul.f32 %v284, 0.1
    %v292 = vmul.f32 %v290, 0.9
    %v293 = vadd.f32 %v291, %v292
    %v294 = vmul.f32 %v285, 0.1
    %v295 = vmul.f32 %v288, 0.9
    %v296 = vadd.f32 %v294, %v295
    %297 = vst [vmem:[#allocation11] sm:$0xff] %v293
    %298 = vst [vmem:[#allocation11 + $0x8] sm:$0xff] %v296
    // Predicated region
    $region42: #{tpu_custom_call.1} parent=1 // pred_check
      _
    $region43: #{tpu_custom_call.1} parent=1 // pred_check_branch
      %300 = sbr.rel (0) target = $region45
    $region44: #{tpu_custom_call.1} parent=1 // pred_region
      %302 = vsyncadd [#allocation4], 0
      %s304 = sshll.u32 [#allocation11], 4
      %s305 = int_to_ptr.vmem [resolvable:$true] %s304
      %s306 = sshll.u32 %s5, 4
      %s307 = int_to_ptr.hbm [resolvable:$true] %s306
      %309 = dma.vmem_to_hbm [thread:$0]  %s305, 256, %s307, [#allocation4]
    $region45: #{tpu_custom_call.1} parent=1 // pred_fallthru
      _
    // Predicated region
    $region46: #{tpu_custom_call.1} parent=1 // pred_check
      _
    $region47: #{tpu_custom_call.1} parent=1 // pred_check_branch
      %311 = sbr.rel (0) target = $region49
    $region48: #{tpu_custom_call.1} parent=1 // pred_region
      %313 = dma.done [#allocation4], 256
    $region49: #{tpu_custom_call.1} parent=1 // pred_fallthru
      _
    %314 = vsyncpa [#allocation3], 1
    %315 = vsyncpa [#allocation6], 1
    %316 = vsyncpa [#allocation9], 1
    %317 = vsyncpa [#allocation4], 1

</llo_original>
